<compile_context>
chip_gen: v5e
topology: v5e:2x2
jax: 0.10.0
libtpu: 0.0.40
codegen_flags: <defaults>
</compile_context>

<pallas_src>
import numpy as np
import jax
import jax.numpy as jnp
from jax.experimental import pallas as pl
from jax.experimental.pallas import tpu as pltpu

_LANES = 128
_SUBLANES = 8
_MAX_TILE_ROWS = 8192          # 4 MiB per f32 input tile


def _round_up(x, m):
    return -(-x // m) * m


def _choose_tile_rows(rows_arr):
    # Aim for ~4 tiles (2 per core) so DMA/compute overlap, but cap the tile
    # at 4 MiB (VMEM) and floor it at one (8,128) vreg.
    tr = _round_up(pl.cdiv(rows_arr, 4), _SUBLANES)
    return max(_SUBLANES, min(_MAX_TILE_ROWS, tr))


def _make_kernel(tr, tpc, rows_arr, needs_mask):
    """tr: tile rows, tpc: tiles per core, rows_arr: real rows in the slab."""

    def kernel(d_ref, t_ref, sum_ref, nan_ref):
        c = pl.program_id(0)          # core slot (parallel)
        t = pl.program_id(1)          # reduction step (arbitrary)

        @pl.when(t == 0)
        def _():
            sum_ref[...] = jnp.zeros_like(sum_ref)
            nan_ref[...] = jnp.zeros_like(nan_ref)

        d = d_ref[...].astype(jnp.float32)     # upcast inside VMEM (no HBM cost)
        g = t_ref[...].astype(jnp.float32)

        absdiff = jnp.abs(d - g)
        nanm = jnp.logical_or(jnp.isnan(d), jnp.isnan(g))

        if needs_mask:
            # Mask rows beyond the real array (partial / duplicated edge tiles).
            tile_idx = c * tpc + t
            row0 = tile_idx * tr
            local = jax.lax.broadcasted_iota(jnp.int32, (tr, 1), 0)
            valid = (row0 + local) < rows_arr
            absdiff = jnp.where(valid, absdiff, 0.0)
            nanm = jnp.logical_and(nanm, valid)

        nanf = nanm.astype(jnp.float32)
        # Fold the (tr,128) tile into one (8,128) vreg: pure elementwise
        # adds/maxes across vregs (VPU), no XLU work in the hot loop.
        sum_ref[...] += absdiff.reshape(tr // _SUBLANES, _SUBLANES, _LANES).sum(axis=0)
        nan_ref[...] = jnp.maximum(
            nan_ref[...],
            nanf.reshape(tr // _SUBLANES, _SUBLANES, _LANES).max(axis=0))

    return kernel


def _l1_sum_and_nan(d2, t2, total):
    """d2, t2: (rows_arr, 128) slabs.  Returns per-core (8,128) partials."""
    rows_arr = d2.shape[0]
    tr = _choose_tile_rows(rows_arr)
    num_tiles = pl.cdiv(rows_arr, tr)
    ncores = 2 if num_tiles >= 2 else 1          # split rows across v7x's 2 TCs
    tpc = pl.cdiv(num_tiles, ncores)
    needs_mask = (ncores * tpc * tr) > rows_arr
    needs_clamp = (ncores * tpc) > num_tiles     # odd tile count -> duplicate tile

    if needs_clamp:
        def in_map(c, t):
            return (jnp.minimum(c * tpc + t, num_tiles - 1), 0)
    else:
        def in_map(c, t):
            return (c * tpc + t, 0)

    kernel = _make_kernel(tr, tpc, rows_arr, needs_mask)

    bytes_in = total * (d2.dtype.itemsize + t2.dtype.itemsize)
    cost = pl.CostEstimate(
        flops=5 * total, transcendentals=0,
        bytes_accessed=bytes_in + 2 * ncores * _SUBLANES * _LANES * 4)

    sums, nans = pl.pallas_call(
        kernel,
        out_shape=(jax.ShapeDtypeStruct((ncores, _SUBLANES, _LANES), jnp.float32),
                   jax.ShapeDtypeStruct((ncores, _SUBLANES, _LANES), jnp.float32)),
        grid=(ncores, tpc),
        in_specs=[pl.BlockSpec((tr, _LANES), in_map),
                  pl.BlockSpec((tr, _LANES), in_map)],
        out_specs=(pl.BlockSpec((None, _SUBLANES, _LANES), lambda c, t: (c, 0, 0)),
                   pl.BlockSpec((None, _SUBLANES, _LANES), lambda c, t: (c, 0, 0))),
        compiler_params=pltpu.CompilerParams(
            dimension_semantics=("parallel", "arbitrary"),
            vmem_limit_bytes=40 * 1024 * 1024),
        cost_estimate=cost,
    )(d2, t2)
    return sums, nans


@jax.jit
def _deblur_loss_device(deblurred, target):
    """Whole device path under one jit: kernel + tiny finalize. Returns
    (recon_loss_scalar_f32, nan_detected_bool)."""
    total = deblurred.size
    d = deblurred.reshape(-1)
    t = target.reshape(-1)
    rows = pl.cdiv(total, _LANES)
    rows_arr = _round_up(rows, _SUBLANES)
    pad = rows_arr * _LANES - total
    if pad:
        # TODO(synk): a non-multiple-of-1024 element count still costs one XLA
        # pad copy (< 1024 extra elems); a 1-D tail kernel could remove it.
        d = jnp.pad(d, (0, pad))
        t = jnp.pad(t, (0, pad))
    d2 = d.reshape(rows_arr, _LANES)      # lane-dense slab, no astype/copy
    t2 = t.reshape(rows_arr, _LANES)

    sums, nans = _l1_sum_and_nan(d2, t2, total)

    total_sum = jnp.sum(sums, dtype=jnp.float32)      # 2x(8,128) -> scalar
    nan_any = jnp.max(nans) > 0.0
    recon = jnp.where(nan_any, jnp.float32(0.0),
                      total_sum / jnp.float32(total))
    return recon, nan_any


def single_scale_deblur_loss(deblurred, target):
    """Mirrors SingleScaleDeblurLoss.forward (eager wrapper; the warning print
    and Python-float stats dict require a host sync, exactly like PyTorch)."""
    if deblurred.shape != target.shape:
        raise ValueError(
            f"Size mismatch: deblurred {deblurred.shape} vs target {target.shape}")

    recon, nan_any = _deblur_loss_device(deblurred, target)

    if bool(nan_any):                       # host sync (== torch .any().item())
        print("Warning: NaN detected in loss calculation")
        return (jnp.float32(0.0),
                {"recon_loss": 0.0, "motion_smooth_loss": 0.0,
                 "temporal_loss": 0.0})

    return (recon,
            {"recon_loss": float(recon), "motion_smooth_loss": 0.0,
             "temporal_loss": 0.0})


if __name__ == "__main__":
    key = jax.random.PRNGKey(0)
    k1, k2 = jax.random.split(key)

    shape = (2, 4, 16, 16)
    deblurred = jax.random.normal(k1, shape, jnp.float32)
    target = jax.random.normal(k2, shape, jnp.float32)

    # Normal path.
    loss, stats = single_scale_deblur_loss(deblurred, target)
    loss = jax.block_until_ready(loss)
    ref = jax.block_until_ready(jnp.mean(jnp.abs(deblurred - target)))
    np.testing.assert_allclose(np.asarray(loss), np.asarray(ref),
                               rtol=1e-5, atol=1e-6)
    np.testing.assert_allclose(stats["recon_loss"], float(ref),
                               rtol=1e-5, atol=1e-6)
    assert stats["motion_smooth_loss"] == 0.0
    assert stats["temporal_loss"] == 0.0

    # NaN path (check the device flag directly; avoids the warning print).
    bad = deblurred.at[0, 0, 0, 0].set(jnp.nan)
    recon_bad, nan_flag = _deblur_loss_device(bad, target)
    assert bool(jax.block_until_ready(nan_flag))
    assert float(recon_bad) == 0.0
    _, nan_ok = _deblur_loss_device(deblurred, target)
    assert not bool(jax.block_until_ready(nan_ok))

    # Ragged total (not a multiple of 1024) -> exercises the pad path.
    shape2 = (3, 5, 33, 40)
    a = jax.random.normal(k1, shape2, jnp.float32)
    b = jax.random.normal(k2, shape2, jnp.float32)
    loss2, _ = single_scale_deblur_loss(a, b)
    np.testing.assert_allclose(np.asarray(loss2),
                               np.asarray(jnp.mean(jnp.abs(a - b))),
                               rtol=1e-5, atol=1e-6)

    # Odd tile count -> exercises the in-kernel row mask + clamped edge tile.
    shape3 = (9, 8, 128)
    a3 = jax.random.normal(k1, shape3, jnp.float32)
    b3 = jax.random.normal(k2, shape3, jnp.float32)
    loss3, _ = single_scale_deblur_loss(a3, b3)
    np.testing.assert_allclose(np.asarray(loss3),
                               np.asarray(jnp.mean(jnp.abs(a3 - b3))),
                               rtol=1e-5, atol=1e-6)

    print("KERNEL_OK")
</pallas_src>

<mosaic_0001>
module attributes {stable_mosaic.version = 11 : i64} {
  func.func @kernel(%arg0: i32, %arg1: i32, %arg2: memref<8x128xf32, #tpu.memory_space<vmem>>, %arg3: memref<8x128xf32, #tpu.memory_space<vmem>>, %arg4: memref<1x8x128xf32, #tpu.memory_space<vmem>>, %arg5: memref<1x8x128xf32, #tpu.memory_space<vmem>>) attributes {dimension_semantics = [#tpu.dimension_semantics<parallel>, #tpu.dimension_semantics<arbitrary>], iteration_bounds = array<i64: 2, 1>, scalar_prefetch = 0 : i64, scratch_operands = 0 : i64, tpu.core_type = #tpu.core_type<tc>, window_params = [{transform_indices = @transform_0, window_bounds = array<i64: 8, 128>}, {transform_indices = @transform_1, window_bounds = array<i64: 8, 128>}, {transform_indices = @transform_2, window_bounds = array<i64: 1, 8, 128>}, {transform_indices = @transform_3, window_bounds = array<i64: 1, 8, 128>}]} {
    %c0_i32 = arith.constant 0 : i32
    %0 = arith.cmpi eq, %arg1, %c0_i32 : i32
    %1 = arith.extui %0 : i1 to i32
    %c0_i32_0 = arith.constant 0 : i32
    %2 = arith.cmpi ne, %1, %c0_i32_0 : i32
    scf.if %2 {
      %cst_17 = arith.constant 0.000000e+00 : f32
      %28 = vector.broadcast %cst_17 : f32 to vector<8x128xf32>
      %c0_18 = arith.constant 0 : index
      %c0_19 = arith.constant 0 : index
      %c0_20 = arith.constant 0 : index
      %29 = vector.load %arg4[%c0_18, %c0_19, %c0_20] : memref<1x8x128xf32, #tpu.memory_space<vmem>>, vector<1x8x128xf32>
      %30 = vector.shape_cast %29 : vector<1x8x128xf32> to vector<8x128xf32>
      %31 = vector.shape_cast %28 : vector<8x128xf32> to vector<1x8x128xf32>
      tpu.vector_store %arg4[%c0_18, %c0_19, %c0_20], %31 {strides = array<i32>} : memref<1x8x128xf32, #tpu.memory_space<vmem>>, vector<1x8x128xf32>,
      %cst_21 = arith.constant 0.000000e+00 : f32
      %32 = vector.broadcast %cst_21 : f32 to vector<8x128xf32>
      %c0_22 = arith.constant 0 : index
      %c0_23 = arith.constant 0 : index
      %c0_24 = arith.constant 0 : index
      %33 = vector.load %arg5[%c0_22, %c0_23, %c0_24] : memref<1x8x128xf32, #tpu.memory_space<vmem>>, vector<1x8x128xf32>
      %34 = vector.shape_cast %33 : vector<1x8x128xf32> to vector<8x128xf32>
      %35 = vector.shape_cast %32 : vector<8x128xf32> to vector<1x8x128xf32>
      tpu.vector_store %arg5[%c0_22, %c0_23, %c0_24], %35 {strides = array<i32>} : memref<1x8x128xf32, #tpu.memory_space<vmem>>, vector<1x8x128xf32>,
    } else {
    }
    %c0 = arith.constant 0 : index
    %c0_1 = arith.constant 0 : index
    %3 = vector.load %arg2[%c0, %c0_1] : memref<8x128xf32, #tpu.memory_space<vmem>>, vector<8x128xf32>
    %c0_2 = arith.constant 0 : index
    %c0_3 = arith.constant 0 : index
    %4 = vector.load %arg3[%c0_2, %c0_3] : memref<8x128xf32, #tpu.memory_space<vmem>>, vector<8x128xf32>
    %5 = arith.subf %3, %4 : vector<8x128xf32>
    %6 = math.absf %5 : vector<8x128xf32>
    %7 = arith.cmpf one, %3, %3 : vector<8x128xf32>
    %8 = arith.cmpf one, %4, %4 : vector<8x128xf32>
    %9 = arith.ori %7, %8 : vector<8x128xi1>
    %10 = arith.extui %9 : vector<8x128xi1> to vector<8x128xi32>
    %11 = arith.sitofp %10 : vector<8x128xi32> to vector<8x128xf32>
    %c0_4 = arith.constant 0 : index
    %c0_5 = arith.constant 0 : index
    %c0_6 = arith.constant 0 : index
    %12 = vector.load %arg4[%c0_4, %c0_5, %c0_6] : memref<1x8x128xf32, #tpu.memory_space<vmem>>, vector<1x8x128xf32>
    %13 = vector.shape_cast %12 : vector<1x8x128xf32> to vector<8x128xf32>
    %14 = vector.shape_cast %6 : vector<8x128xf32> to vector<1x8x128xf32>
    %cst = arith.constant dense<0.000000e+00> : vector<8x128xf32>
    %15 = vector.multi_reduction <add>, %14, %cst [0] : vector<1x8x128xf32> to vector<8x128xf32>
    %16 = arith.addf %13, %15 : vector<8x128xf32>
    %c0_7 = arith.constant 0 : index
    %c0_8 = arith.constant 0 : index
    %c0_9 = arith.constant 0 : index
    %17 = vector.load %arg4[%c0_7, %c0_8, %c0_9] : memref<1x8x128xf32, #tpu.memory_space<vmem>>, vector<1x8x128xf32>
    %18 = vector.shape_cast %17 : vector<1x8x128xf32> to vector<8x128xf32>
    %19 = vector.shape_cast %16 : vector<8x128xf32> to vector<1x8x128xf32>
    tpu.vector_store %arg4[%c0_7, %c0_8, %c0_9], %19 {strides = array<i32>} : memref<1x8x128xf32, #tpu.memory_space<vmem>>, vector<1x8x128xf32>,
    %c0_10 = arith.constant 0 : index
    %c0_11 = arith.constant 0 : index
    %c0_12 = arith.constant 0 : index
    %20 = vector.load %arg5[%c0_10, %c0_11, %c0_12] : memref<1x8x128xf32, #tpu.memory_space<vmem>>, vector<1x8x128xf32>
    %21 = vector.shape_cast %20 : vector<1x8x128xf32> to vector<8x128xf32>
    %22 = vector.shape_cast %11 : vector<8x128xf32> to vector<1x8x128xf32>
    %cst_13 = arith.constant dense<0xFF800000> : vector<8x128xf32>
    %23 = vector.multi_reduction <maximumf>, %22, %cst_13 [0] : vector<1x8x128xf32> to vector<8x128xf32>
    %24 = arith.maximumf %21, %23 : vector<8x128xf32>
    %c0_14 = arith.constant 0 : index
    %c0_15 = arith.constant 0 : index
    %c0_16 = arith.constant 0 : index
    %25 = vector.load %arg5[%c0_14, %c0_15, %c0_16] : memref<1x8x128xf32, #tpu.memory_space<vmem>>, vector<1x8x128xf32>
    %26 = vector.shape_cast %25 : vector<1x8x128xf32> to vector<8x128xf32>
    %27 = vector.shape_cast %24 : vector<8x128xf32> to vector<1x8x128xf32>
    tpu.vector_store %arg5[%c0_14, %c0_15, %c0_16], %27 {strides = array<i32>} : memref<1x8x128xf32, #tpu.memory_space<vmem>>, vector<1x8x128xf32>,
    return
  }
  func.func @transform_0(%arg0: i32, %arg1: i32) -> (i32, i32) {
    %c1_i32 = arith.constant 1 : i32
    %0 = arith.muli %arg0, %c1_i32 : i32
    %1 = arith.addi %0, %arg1 : i32
    %c0_i32 = arith.constant 0 : i32
    %c0_i32_0 = arith.constant 0 : i32
    return %1, %c0_i32 : i32, i32
  }
  func.func @transform_1(%arg0: i32, %arg1: i32) -> (i32, i32) {
    %c1_i32 = arith.constant 1 : i32
    %0 = arith.muli %arg0, %c1_i32 : i32
    %1 = arith.addi %0, %arg1 : i32
    %c0_i32 = arith.constant 0 : i32
    %c0_i32_0 = arith.constant 0 : i32
    return %1, %c0_i32 : i32, i32
  }
  func.func @transform_2(%arg0: i32, %arg1: i32) -> (i32, i32, i32) {
    %c0_i32 = arith.constant 0 : i32
    %c0_i32_0 = arith.constant 0 : i32
    %c0_i32_1 = arith.constant 0 : i32
    return %arg0, %c0_i32, %c0_i32_0 : i32, i32, i32
  }
  func.func @transform_3(%arg0: i32, %arg1: i32) -> (i32, i32, i32) {
    %c0_i32 = arith.constant 0 : i32
    %c0_i32_0 = arith.constant 0 : i32
    %c0_i32_1 = arith.constant 0 : i32
    return %arg0, %c0_i32, %c0_i32_0 : i32, i32, i32
  }
}

</mosaic_0001>

<llo_original>
// kernel: _deblur_loss_device.1
$region0: #{_deblur_loss_device.1}
  #allocation0 [shape = 'u32[]', space=smem, size = 0x4, offset = 0x4, fixed_abs, tag = 'smem constant byte address 0x4 - core index']
  #allocation1 [shape = 'u32[72,128]{1,0:T(1,128)}', space=vmem, size = 0x9000, scoped, tag = 'internal scratch']
  %s0 = inlined_call_operand.vmem [shape: f32[16,128], index: 0, kind: input, shape index: {}]
  %s1 = inlined_call_operand.vmem [shape: f32[16,128], index: 1, kind: input, shape index: {}]
  %s2 = inlined_call_operand.vmem [shape: f32[2,8,128], index: 2, kind: output, shape index: {0}]
  %s3 = inlined_call_operand.vmem [shape: f32[2,8,128], index: 3, kind: output, shape index: {1}]
  %4 = xla_tuple %s2, %s3
  %s5 = sld [smem:[#allocation0]]
  $region53: #{_deblur_loss_device.1} parent=0
    _
  %s7 = ssub.s32 1, %s5
  %s8 = scalar_select 0, %s7, %s5
  loop: start=0, step=1, limit=4
  $region2: #{_deblur_loss_device.1} parent=0 // loop_pre_header
    _
  $region3: #{_deblur_loss_device.1} parent=0 // loop_header
    %s10 = sphi 0, %s14
    %p11 = scmp.ge.s32.totalorder %s10, 4
    %s17 = sphi 0, %s29
    %s18 = sphi 0, %s25
    %s19 = sphi 0, %s17
    %s20 = sphi 0, %s18
    %s21 = sphi 0, %s19
    %s22 = sphi 0, %s20
    %s34 = sphi 0, %s36
    %s37 = sphi 0, %s34
    %s38 = sphi 0, %s37
    %s54 = sphi 0, %s38
    %s62 = sphi 0, %s64
    %s65 = sphi 0, %s62
    %s66 = sphi 0, %s65
    %s82 = sphi 0, %s66
    %s88 = sphi 0, %s90
    %s91 = sphi 0, %s88
    %s92 = sphi 0, %s91
    %s108 = sphi 0, %s92
    %s114 = sphi 0, %s116
    %s117 = sphi 0, %s114
    %s118 = sphi 0, %s117
    %s134 = sphi 0, %s118
  $region4: #{_deblur_loss_device.1} parent=0 // loop_header_branch
    %13 = sbr.rel (%p11) target = $region8
  $region5: #{_deblur_loss_device.1} parent=0 // loop_body
    %s15 = ssub.s32 %s10, 1
    %s16 = ssub.s32 %s10, 2
    %s23 = sadd.s32 1, %s18
    %p24 = scmp.ge.s32.totalorder %s23, 1
    %s25 = scalar_select %p24, 0, %s23
    %s26 = sadd.s32 1, %s17
    %s27 = scalar_select %p24, %s26, %s17
    %p28 = scmp.ge.s32.totalorder %s27, 2
    %s29 = scalar_select %p28, 0, %s27
    %s30 = sadd.s32 %s17, %s18
    %s31 = sadd.s32 %s29, %s25
    %s32 = ssub.s32 %s30, %s31
    %p33 = scmp.eq.s32.totalorder %s32, 0
    %s35 = sadd.s32 %s34, 1
    %s36 = scalar_select %p33, %s34, %s35
    %p39 = pneg %p33
    %p40 = scmp.eq.s32.totalorder %s10, 1
    %p41 = por %p39, %p40
    %p42 = scmp.ne.s32.totalorder %s34, %s37
    %p43 = scmp.eq.s32.totalorder %s10, 0
    %p44 = por %p42, %p43
    %p45 = scmp.ne.s32.totalorder %s34, %s37
    %p46 = scmp.eq.s32.totalorder %s15, 1
    %p47 = por %p45, %p46
    %p48 = scmp.ne.s32.totalorder %s37, %s38
    %p49 = scmp.eq.s32.totalorder %s15, 0
    %p50 = por %p48, %p49
    %p51 = scmp.ne.s32.totalorder %s37, %s38
    %p52 = scmp.eq.s32.totalorder %s16, 1
    %p53 = por %p51, %p52
    %p55 = scmp.ne.s32.totalorder %s38, %s54
    %p56 = scmp.eq.s32.totalorder %s16, 0
    %p57 = por %p55, %p56
    %s58 = sadd.s32 %s17, %s18
    %s59 = sadd.s32 %s29, %s25
    %s60 = ssub.s32 %s58, %s59
    %p61 = scmp.eq.s32.totalorder %s60, 0
    %s63 = sadd.s32 %s62, 1
    %s64 = scalar_select %p61, %s62, %s63
    %p67 = pneg %p61
    %p68 = scmp.eq.s32.totalorder %s10, 1
    %p69 = por %p67, %p68
    %p70 = scmp.ne.s32.totalorder %s62, %s65
    %p71 = scmp.eq.s32.totalorder %s10, 0
    %p72 = por %p70, %p71
    %p73 = scmp.ne.s32.totalorder %s62, %s65
    %p74 = scmp.eq.s32.totalorder %s15, 1
    %p75 = por %p73, %p74
    %p76 = scmp.ne.s32.totalorder %s65, %s66
    %p77 = scmp.eq.s32.totalorder %s15, 0
    %p78 = por %p76, %p77
    %p79 = scmp.ne.s32.totalorder %s65, %s66
    %p80 = scmp.eq.s32.totalorder %s16, 1
    %p81 = por %p79, %p80
    %p83 = scmp.ne.s32.totalorder %s66, %s82
    %p84 = scmp.eq.s32.totalorder %s16, 0
    %p85 = por %p83, %p84
    %s86 = ssub.s32 %s17, %s29
    %p87 = scmp.eq.s32.totalorder %s86, 0
    %s89 = sadd.s32 %s88, 1
    %s90 = scalar_select %p87, %s88, %s89
    %p93 = pneg %p87
    %p94 = scmp.eq.s32.totalorder %s10, 1
    %p95 = por %p93, %p94
    %p96 = scmp.ne.s32.totalorder %s88, %s91
    %p97 = scmp.eq.s32.totalorder %s10, 0
    %p98 = por %p96, %p97
    %p99 = scmp.ne.s32.totalorder %s88, %s91
    %p100 = scmp.eq.s32.totalorder %s15, 1
    %p101 = por %p99, %p100
    %p102 = scmp.ne.s32.totalorder %s91, %s92
    %p103 = scmp.eq.s32.totalorder %s15, 0
    %p104 = por %p102, %p103
    %p105 = scmp.ne.s32.totalorder %s91, %s92
    %p106 = scmp.eq.s32.totalorder %s16, 1
    %p107 = por %p105, %p106
    %p109 = scmp.ne.s32.totalorder %s92, %s108
    %p110 = scmp.eq.s32.totalorder %s16, 0
    %p111 = por %p109, %p110
    %s112 = ssub.s32 %s17, %s29
    %p113 = scmp.eq.s32.totalorder %s112, 0
    %s115 = sadd.s32 %s114, 1
    %s116 = scalar_select %p113, %s114, %s115
    %p119 = pneg %p113
    %p120 = scmp.eq.s32.totalorder %s10, 1
    %p121 = por %p119, %p120
    %p122 = scmp.ne.s32.totalorder %s114, %s117
    %p123 = scmp.eq.s32.totalorder %s10, 0
    %p124 = por %p122, %p123
    %p125 = scmp.ne.s32.totalorder %s114, %s117
    %p126 = scmp.eq.s32.totalorder %s15, 1
    %p127 = por %p125, %p126
    %p128 = scmp.ne.s32.totalorder %s117, %s118
    %p129 = scmp.eq.s32.totalorder %s15, 0
    %p130 = por %p128, %p129
    %p131 = scmp.ne.s32.totalorder %s117, %s118
    %p132 = scmp.eq.s32.totalorder %s16, 1
    %p133 = por %p131, %p132
    %p135 = scmp.ne.s32.totalorder %s118, %s134
    %p136 = scmp.eq.s32.totalorder %s16, 0
    %p137 = por %p135, %p136
    %p138 = scmp.le.s32.totalorder 1, %s10
    %p139 = scmp.lt.s32.totalorder %s10, 3
    %p140 = pnand %p138, %p139
    %p141 = pneg %p140
    // Predicated region
    $region9: #{_deblur_loss_device.1} parent=5 // pred_check
      _
    $region10: #{_deblur_loss_device.1} parent=5 // pred_check_branch
      %143 = sbr.rel (%p140) target = $region12
    $region11: #{_deblur_loss_device.1} parent=5 // pred_region
      %s144 = ssub.s32 %s10, 1
    $region12: #{_deblur_loss_device.1} parent=5 // pred_fallthru
      _
    %p145 = scmp.lt.s32.totalorder %s10, 2
    // Predicated region
    $region13: #{_deblur_loss_device.1} parent=5 // pred_check
      %p146 = pneg %p145
    $region14: #{_deblur_loss_device.1} parent=5 // pred_check_branch
      %148 = sbr.rel (%p146) target = $region16
    $region15: #{_deblur_loss_device.1} parent=5 // pred_region
      // Predicated region
      $region17: #{_deblur_loss_device.1} parent=15 // pred_check
        %p149 = pneg %p44
      $region18: #{_deblur_loss_device.1} parent=15 // pred_check_branch
        %151 = sbr.rel (%p149) target = $region20
      $region19: #{_deblur_loss_device.1} parent=15 // pred_region
        %s152 = sadd.s32 %s17, %s18
        %p153 = scmp.lt.s32.totalorder %s152, 1
        %s154 = scalar_select %p153, %s152, 1
        %s155 = smul.addr %s154, 8
        %s156 = scalar_lea.vmem %s0, %s155
        %s157 = sadd.s32 %s17, %s18
      $region20: #{_deblur_loss_device.1} parent=15 // pred_fallthru
        _
      // Predicated region
      $region21: #{_deblur_loss_device.1} parent=15 // pred_check
        %p158 = pneg %p72
      $region22: #{_deblur_loss_device.1} parent=15 // pred_check_branch
        %160 = sbr.rel (%p158) target = $region24
      $region23: #{_deblur_loss_device.1} parent=15 // pred_region
        %s161 = sadd.s32 %s17, %s18
        %p162 = scmp.lt.s32.totalorder %s161, 1
        %s163 = scalar_select %p162, %s161, 1
        %s164 = smul.addr %s163, 8
        %s165 = scalar_lea.vmem %s1, %s164
        %s166 = sadd.s32 %s17, %s18
      $region24: #{_deblur_loss_device.1} parent=15 // pred_fallthru
        _
    $region16: #{_deblur_loss_device.1} parent=5 // pred_fallthru
      _
    %p167 = scmp.le.s32.totalorder 1, %s10
    %p168 = scmp.lt.s32.totalorder %s10, 3
    %p169 = pnand %p167, %p168
    %p170 = pneg %p169
    // Predicated region
    $region25: #{_deblur_loss_device.1} parent=5 // pred_check
      _
    $region26: #{_deblur_loss_device.1} parent=5 // pred_check_branch
      %172 = sbr.rel (%p169) target = $region28
    $region27: #{_deblur_loss_device.1} parent=5 // pred_region
      %s173 = ssub.s32 %s10, 1
      %s174 = sadd.s32 %s19, %s20
      %p175 = scmp.lt.s32.totalorder %s174, 1
      %s176 = scalar_select %p175, %s174, 1
      %s177 = smul.addr %s176, 8
      %s178 = scalar_lea.vmem %s0, %s177
      %p179 = pneg %p50
      %p180 = pneg %p47
      %s181 = sadd.s32 %s19, %s20
      %p182 = scmp.lt.s32.totalorder %s181, 1
      %s183 = scalar_select %p182, %s181, 1
      %s184 = smul.addr %s183, 8
      %s185 = scalar_lea.vmem %s1, %s184
      %p186 = pneg %p78
      %p187 = pneg %p75
      %p188 = pneg %p104
      %p189 = pneg %p101
      %p190 = scmp.lt.s32.totalorder %s19, 1
      %s191 = scalar_select %p190, %s19, 1
      %s192 = smul.addr %s191, 8
      %s193 = scalar_lea.vmem %s2, %s192
      %p194 = pneg %p130
      %p195 = pneg %p127
      %p196 = scmp.lt.s32.totalorder %s19, 1
      %s197 = scalar_select %p196, %s19, 1
      %s198 = smul.addr %s197, 8
      %s199 = scalar_lea.vmem %s3, %s198
      %s200 = sadd.s32 %s19, %s20
      %p201 = scmp.lt.s32.totalorder %s200, 1
      %s202 = scalar_select %p201, %s200, 1
      %s203 = smul.addr %s202, 8
      %s204 = scalar_lea.vmem %s0, %s203
      %s205 = sadd.s32 %s19, %s20
      %s206 = sadd.s32 %s19, %s20
      %p207 = scmp.lt.s32.totalorder %s206, 1
      %s208 = scalar_select %p207, %s206, 1
      %s209 = smul.addr %s208, 8
      %s210 = scalar_lea.vmem %s1, %s209
      %s211 = sadd.s32 %s19, %s20
      %p212 = scmp.lt.s32.totalorder %s19, 1
      %s213 = scalar_select %p212, %s19, 1
      %s214 = smul.addr %s213, 8
      %s215 = scalar_lea.vmem %s2, %s214
      %p216 = scmp.lt.s32.totalorder %s19, 1
      %s217 = scalar_select %p216, %s19, 1
      %s218 = smul.addr %s217, 8
      %s219 = scalar_lea.vmem %s3, %s218
      %p220 = scmp.eq.s32.totalorder %s20, 0
      // Predicated region
      $region29: #{_deblur_loss_device.1} parent=27 // pred_check
        %p221 = pneg %p220
      $region30: #{_deblur_loss_device.1} parent=27 // pred_check_branch
        %223 = sbr.rel (%p221) target = $region32
      $region31: #{_deblur_loss_device.1} parent=27 // pred_region
        %224 = vst [vmem:[%s215] sm:$0xff] 0.0
        %225 = vst [vmem:[%s219] sm:$0xff] 0.0
      $region32: #{_deblur_loss_device.1} parent=27 // pred_fallthru
        _
      %v226 = vld [vmem:[%s204] sm:$0xff]
      %v227 = vld [vmem:[%s210] sm:$0xff]
      %v228 = vsub.f32 %v226, %v227
      %v229 = vand.u32 2147483647, %v228
      %vm230 = vcmp.ne.f32.partialorder %v226, %v226
      %vm231 = vcmp.ne.f32.partialorder %v227, %v227
      %vm232 = vmor %vm230, %vm231
      %v233 = vsel %vm232, 1, 0
      %v234 = vcvt.s32.f32 %v233
      %v235 = vld [vmem:[%s215] sm:$0xff]
      %v236 = vadd.f32 %v229, 0.0
      %v237 = vadd.f32 %v235, %v236
      %238 = vst [vmem:[%s215] sm:$0xff] %v237
      %v239 = vld [vmem:[%s219] sm:$0xff]
      %v240 = vmax.f32 %v239, %v234
      %241 = vst [vmem:[%s219] sm:$0xff] %v240
      %p242 = scmp.lt.s32.totalorder %s19, 1
      %s243 = scalar_select %p242, %s19, 1
      %s244 = smul.addr %s243, 8
      %s245 = scalar_lea.vmem %s2, %s244
      %p246 = scmp.lt.s32.totalorder %s19, 1
      %s247 = scalar_select %p246, %s19, 1
      %s248 = smul.addr %s247, 8
      %s249 = scalar_lea.vmem %s3, %s248
      // Predicated region
      $region33: #{_deblur_loss_device.1} parent=27 // pred_check
        %p250 = pneg %p101
      $region34: #{_deblur_loss_device.1} parent=27 // pred_check_branch
        %252 = sbr.rel (%p250) target = $region36
      $region35: #{_deblur_loss_device.1} parent=27 // pred_region
        _
      $region36: #{_deblur_loss_device.1} parent=27 // pred_fallthru
        _
      // Predicated region
      $region37: #{_deblur_loss_device.1} parent=27 // pred_check
        %p253 = pneg %p127
      $region38: #{_deblur_loss_device.1} parent=27 // pred_check_branch
        %255 = sbr.rel (%p253) target = $region40
      $region39: #{_deblur_loss_device.1} parent=27 // pred_region
        _
      $region40: #{_deblur_loss_device.1} parent=27 // pred_fallthru
        _
    $region28: #{_deblur_loss_device.1} parent=5 // pred_fallthru
      _
    %p256 = scmp.le.s32.totalorder 2, %s10
    // Predicated region
    $region41: #{_deblur_loss_device.1} parent=5 // pred_check
      %p257 = pneg %p256
    $region42: #{_deblur_loss_device.1} parent=5 // pred_check_branch
      %259 = sbr.rel (%p257) target = $region44
    $region43: #{_deblur_loss_device.1} parent=5 // pred_region
      %s260 = ssub.s32 %s10, 2
      // Predicated region
      $region45: #{_deblur_loss_device.1} parent=43 // pred_check
        %p261 = pneg %p107
      $region46: #{_deblur_loss_device.1} parent=43 // pred_check_branch
        %263 = sbr.rel (%p261) target = $region48
      $region47: #{_deblur_loss_device.1} parent=43 // pred_region
        %p264 = scmp.lt.s32.totalorder %s21, 1
        %s265 = scalar_select %p264, %s21, 1
        %s266 = smul.addr %s265, 8
        %s267 = scalar_lea.vmem %s2, %s266
      $region48: #{_deblur_loss_device.1} parent=43 // pred_fallthru
        _
      // Predicated region
      $region49: #{_deblur_loss_device.1} parent=43 // pred_check
        %p268 = pneg %p133
      $region50: #{_deblur_loss_device.1} parent=43 // pred_check_branch
        %270 = sbr.rel (%p268) target = $region52
      $region51: #{_deblur_loss_device.1} parent=43 // pred_region
        %p271 = scmp.lt.s32.totalorder %s21, 1
        %s272 = scalar_select %p271, %s21, 1
        %s273 = smul.addr %s272, 8
        %s274 = scalar_lea.vmem %s3, %s273
      $region52: #{_deblur_loss_device.1} parent=43 // pred_fallthru
        _
    $region44: #{_deblur_loss_device.1} parent=5 // pred_fallthru
      _
  $region6: #{_deblur_loss_device.1} parent=0 // loop_footer
    %s14 = sadd.s32 1, %s10
  $region7: #{_deblur_loss_device.1} parent=0 // loop_footer_branch
    %9 = sbr.rel target = $region3
  $region8: #{_deblur_loss_device.1} parent=0 // loop_exit
    _

</llo_original>
